<compile_context>
chip_gen: v5e
topology: v5e:2x2
jax: 0.10.0
libtpu: 0.0.40
codegen_flags: <defaults>
</compile_context>

<pallas_src>
import functools

import jax
import jax.numpy as jnp
from jax.experimental import pallas as pl
from jax.experimental.pallas import tpu as pltpu

_SELU_ALPHA = 1.6732632423543772848170429916717
_SELU_SCALE = 1.0507009873554804934193349852946
_SELU_SCALE_ALPHA = _SELU_SCALE * _SELU_ALPHA


def _round_up(n: int, m: int) -> int:
    return ((n + m - 1) // m) * m


def _selu(y):
    # jnp.where evaluates both branches: clamp the exp argument so large
    # positive y never reaches the EUP with +inf in the dead branch.
    neg = _SELU_SCALE_ALPHA * (jnp.exp(jnp.minimum(y, 0.0)) - 1.0)
    return jnp.where(y > 0.0, _SELU_SCALE * y, neg)


def _fused_mlp_kernel(*refs, num_layers: int):
    """refs = (x_ref, w0, b0, w1, b1, ..., wN, bN, o_ref); all tiles in VMEM."""
    x_ref = refs[0]
    o_ref = refs[-1]
    wb_refs = refs[1:-1]

    h = x_ref[...]                                  # (TILE_B, Din_pad) f32
    for layer in range(num_layers):
        w = wb_refs[2 * layer][...]                 # (Din_pad, Dout_pad)
        b = wb_refs[2 * layer + 1][...]             # (1, Dout_pad) broadcasts
        h = jnp.dot(h, w, preferred_element_type=jnp.float32) + b
        if layer < num_layers - 1:                  # SELU on hidden layers only
            h = _selu(h)
    o_ref[...] = h.astype(o_ref.dtype)


def _pad_params(params):
    """Zero-pad weights/biases to lane-dense (multiple-of-128) feature dims."""
    padded = []
    for w, b in params:
        fan_in, fan_out = w.shape
        fi_p, fo_p = _round_up(fan_in, 128), _round_up(fan_out, 128)
        wp = jnp.zeros((fi_p, fo_p), jnp.float32).at[:fan_in, :fan_out].set(w)
        bp = jnp.zeros((1, fo_p), jnp.float32).at[0, :fan_out].set(b)
        padded.append((wp, bp))
    return padded


def assis_net_forward(x, params, *, tile_b: int = 512):
    """Fused forward pass of _assis_net: SELU after every layer except the last.

    x: (B, fit_period) f32; params: list of (w (in,out), b (out,)) f32.
    """
    B, din = x.shape
    dout = params[-1][0].shape[1]

    pparams = _pad_params(params)
    din_pad = pparams[0][0].shape[0]
    dout_pad = pparams[-1][0].shape[1]

    # Batch tiling: large batches are gridded (weights stay resident, the
    # activation tiles pipeline); tiny batches collapse to a single grid step.
    tile_b = min(tile_b, _round_up(B, 8))
    b_pad = _round_up(B, tile_b)
    xp = jnp.zeros((b_pad, din_pad), jnp.float32).at[:B, :din].set(x)

    num_layers = len(pparams)
    kernel = functools.partial(_fused_mlp_kernel, num_layers=num_layers)

    in_specs = [pl.BlockSpec((tile_b, din_pad), lambda i: (i, 0))]
    flat_wb = []
    for wp, bp in pparams:
        in_specs.append(pl.BlockSpec(wp.shape, lambda i: (0, 0)))   # resident
        in_specs.append(pl.BlockSpec(bp.shape, lambda i: (0, 0)))   # resident
        flat_wb.extend([wp, bp])

    out = pl.pallas_call(
        kernel,
        out_shape=jax.ShapeDtypeStruct((b_pad, dout_pad), jnp.float32),
        grid=(b_pad // tile_b,),
        in_specs=in_specs,
        out_specs=pl.BlockSpec((tile_b, dout_pad), lambda i: (i, 0)),
        compiler_params=pltpu.CompilerParams(
            dimension_semantics=("parallel",)),   # v7x: shard batch over 2 TCs
    )(xp, *flat_wb)

    return out[:B, :dout]


def init_assis_net_params(key, hiddenlayer, forward_dim, fit_period):
    """PyTorch-like nn.Linear init: U(-1/sqrt(fan_in), 1/sqrt(fan_in))."""
    layer_nodes = [fit_period] + list(hiddenlayer) + [forward_dim]
    params = []
    for idx in range(len(layer_nodes) - 1):
        fan_in, fan_out = layer_nodes[idx], layer_nodes[idx + 1]
        key, kw, kb = jax.random.split(key, 3)
        bound = 1.0 / jnp.sqrt(jnp.float32(fan_in))
        # stored as (in, out) so the kernel computes x @ W + b
        w = jax.random.uniform(kw, (fan_in, fan_out), jnp.float32, -bound, bound)
        b = jax.random.uniform(kb, (fan_out,), jnp.float32, -bound, bound)
        params.append((w, b))
    return params


def _reference_forward(x, params):
    """Pure-JAX reference for correctness check."""
    for w, b in params[:-1]:
        x = jax.nn.selu(x @ w + b)
    w, b = params[-1]
    return x @ w + b


if __name__ == "__main__":
    # Small shapes consistent with the module: fit_period (input dim) = 32,
    # hidden layers = [64, 48], forward (output dim) = 16, batch = 8.
    fit_period = 32
    hiddenlayer = [64, 48]
    forward_dim = 16
    batch = 8

    key = jax.random.PRNGKey(0)
    key, kx = jax.random.split(key)
    x = jax.random.normal(kx, (batch, fit_period), jnp.float32)

    params = init_assis_net_params(key, hiddenlayer, forward_dim, fit_period)

    out = assis_net_forward(x, params)
    out = jax.block_until_ready(out)

    ref = _reference_forward(x, params)
    assert out.shape == (batch, forward_dim), out.shape
    assert jnp.allclose(out, ref, atol=1e-4, rtol=1e-4), "mismatch vs reference"

    print("KERNEL_OK")
</pallas_src>

<mosaic_0001>
module attributes {stable_mosaic.version = 11 : i64} {
  func.func @_fused_mlp_kernel(%arg0: i32, %arg1: memref<8x128xf32, #tpu.memory_space<vmem>>, %arg2: memref<128x128xf32, #tpu.memory_space<vmem>>, %arg3: memref<1x128xf32, #tpu.memory_space<vmem>>, %arg4: memref<128x128xf32, #tpu.memory_space<vmem>>, %arg5: memref<1x128xf32, #tpu.memory_space<vmem>>, %arg6: memref<128x128xf32, #tpu.memory_space<vmem>>, %arg7: memref<1x128xf32, #tpu.memory_space<vmem>>, %arg8: memref<8x128xf32, #tpu.memory_space<vmem>>) attributes {dimension_semantics = [#tpu.dimension_semantics<parallel>], iteration_bounds = array<i64: 1>, scalar_prefetch = 0 : i64, scratch_operands = 0 : i64, tpu.core_type = #tpu.core_type<tc>, window_params = [{transform_indices = @transform_0, window_bounds = array<i64: 8, 128>}, {pipeline_mode = #tpu.pipeline_mode<synchronous>, transform_indices = @transform_1, window_bounds = array<i64: 128, 128>}, {pipeline_mode = #tpu.pipeline_mode<synchronous>, transform_indices = @transform_2, window_bounds = array<i64: 1, 128>}, {pipeline_mode = #tpu.pipeline_mode<synchronous>, transform_indices = @transform_3, window_bounds = array<i64: 128, 128>}, {pipeline_mode = #tpu.pipeline_mode<synchronous>, transform_indices = @transform_4, window_bounds = array<i64: 1, 128>}, {pipeline_mode = #tpu.pipeline_mode<synchronous>, transform_indices = @transform_5, window_bounds = array<i64: 128, 128>}, {pipeline_mode = #tpu.pipeline_mode<synchronous>, transform_indices = @transform_6, window_bounds = array<i64: 1, 128>}, {transform_indices = @transform_7, window_bounds = array<i64: 8, 128>}]} {
    %c0 = arith.constant 0 : index
    %c0_0 = arith.constant 0 : index
    %0 = vector.load %arg1[%c0, %c0_0] : memref<8x128xf32, #tpu.memory_space<vmem>>, vector<8x128xf32>
    %c0_1 = arith.constant 0 : index
    %c0_2 = arith.constant 0 : index
    %1 = vector.load %arg2[%c0_1, %c0_2] : memref<128x128xf32, #tpu.memory_space<vmem>>, vector<128x128xf32>
    %c0_3 = arith.constant 0 : index
    %c0_4 = arith.constant 0 : index
    %2 = vector.load %arg3[%c0_3, %c0_4] : memref<1x128xf32, #tpu.memory_space<vmem>>, vector<1x128xf32>
    %cst = arith.constant dense<0.000000e+00> : vector<8x128xf32>
    %3 = tpu.matmul %0, %1, %cst {dimension_numbers = #tpu.dot_dimension_numbers<[1], [0], [0], [1], [0, 0, 1, 1], [], []>} : vector<8x128xf32>, vector<128x128xf32>, vector<8x128xf32> -> vector<8x128xf32>
    %4 = vector.broadcast %2 : vector<1x128xf32> to vector<8x128xf32>
    %5 = arith.addf %3, %4 : vector<8x128xf32>
    %cst_5 = arith.constant 0.000000e+00 : f32
    %6 = vector.broadcast %cst_5 : f32 to vector<8x128xf32>
    %7 = arith.minimumf %5, %6 : vector<8x128xf32>
    %8 = math.exp %7 : vector<8x128xf32>
    %cst_6 = arith.constant 1.000000e+00 : f32
    %9 = vector.broadcast %cst_6 : f32 to vector<8x128xf32>
    %10 = arith.subf %8, %9 : vector<8x128xf32>
    %cst_7 = arith.constant 1.75809932 : f32
    %11 = vector.broadcast %cst_7 : f32 to vector<8x128xf32>
    %12 = arith.mulf %11, %10 : vector<8x128xf32>
    %cst_8 = arith.constant 0.000000e+00 : f32
    %13 = vector.broadcast %cst_8 : f32 to vector<8x128xf32>
    %14 = arith.cmpf ogt, %5, %13 : vector<8x128xf32>
    %cst_9 = arith.constant 1.05070102 : f32
    %15 = vector.broadcast %cst_9 : f32 to vector<8x128xf32>
    %16 = arith.mulf %15, %5 : vector<8x128xf32>
    %17 = arith.select %14, %16, %12 : vector<8x128xi1>, vector<8x128xf32>
    %c0_10 = arith.constant 0 : index
    %c0_11 = arith.constant 0 : index
    %18 = vector.load %arg4[%c0_10, %c0_11] : memref<128x128xf32, #tpu.memory_space<vmem>>, vector<128x128xf32>
    %c0_12 = arith.constant 0 : index
    %c0_13 = arith.constant 0 : index
    %19 = vector.load %arg5[%c0_12, %c0_13] : memref<1x128xf32, #tpu.memory_space<vmem>>, vector<1x128xf32>
    %cst_14 = arith.constant dense<0.000000e+00> : vector<8x128xf32>
    %20 = tpu.matmul %17, %18, %cst_14 {dimension_numbers = #tpu.dot_dimension_numbers<[1], [0], [0], [1], [0, 0, 1, 1], [], []>} : vector<8x128xf32>, vector<128x128xf32>, vector<8x128xf32> -> vector<8x128xf32>
    %21 = vector.broadcast %19 : vector<1x128xf32> to vector<8x128xf32>
    %22 = arith.addf %20, %21 : vector<8x128xf32>
    %cst_15 = arith.constant 0.000000e+00 : f32
    %23 = vector.broadcast %cst_15 : f32 to vector<8x128xf32>
    %24 = arith.minimumf %22, %23 : vector<8x128xf32>
    %25 = math.exp %24 : vector<8x128xf32>
    %cst_16 = arith.constant 1.000000e+00 : f32
    %26 = vector.broadcast %cst_16 : f32 to vector<8x128xf32>
    %27 = arith.subf %25, %26 : vector<8x128xf32>
    %cst_17 = arith.constant 1.75809932 : f32
    %28 = vector.broadcast %cst_17 : f32 to vector<8x128xf32>
    %29 = arith.mulf %28, %27 : vector<8x128xf32>
    %cst_18 = arith.constant 0.000000e+00 : f32
    %30 = vector.broadcast %cst_18 : f32 to vector<8x128xf32>
    %31 = arith.cmpf ogt, %22, %30 : vector<8x128xf32>
    %cst_19 = arith.constant 1.05070102 : f32
    %32 = vector.broadcast %cst_19 : f32 to vector<8x128xf32>
    %33 = arith.mulf %32, %22 : vector<8x128xf32>
    %34 = arith.select %31, %33, %29 : vector<8x128xi1>, vector<8x128xf32>
    %c0_20 = arith.constant 0 : index
    %c0_21 = arith.constant 0 : index
    %35 = vector.load %arg6[%c0_20, %c0_21] : memref<128x128xf32, #tpu.memory_space<vmem>>, vector<128x128xf32>
    %c0_22 = arith.constant 0 : index
    %c0_23 = arith.constant 0 : index
    %36 = vector.load %arg7[%c0_22, %c0_23] : memref<1x128xf32, #tpu.memory_space<vmem>>, vector<1x128xf32>
    %cst_24 = arith.constant dense<0.000000e+00> : vector<8x128xf32>
    %37 = tpu.matmul %34, %35, %cst_24 {dimension_numbers = #tpu.dot_dimension_numbers<[1], [0], [0], [1], [0, 0, 1, 1], [], []>} : vector<8x128xf32>, vector<128x128xf32>, vector<8x128xf32> -> vector<8x128xf32>
    %38 = vector.broadcast %36 : vector<1x128xf32> to vector<8x128xf32>
    %39 = arith.addf %37, %38 : vector<8x128xf32>
    %c0_25 = arith.constant 0 : index
    %c0_26 = arith.constant 0 : index
    %40 = vector.load %arg8[%c0_25, %c0_26] : memref<8x128xf32, #tpu.memory_space<vmem>>, vector<8x128xf32>
    tpu.vector_store %arg8[%c0_25, %c0_26], %39 {strides = array<i32>} : memref<8x128xf32, #tpu.memory_space<vmem>>, vector<8x128xf32>,
    return
  }
  func.func @transform_0(%arg0: i32) -> (i32, i32) {
    %c0_i32 = arith.constant 0 : i32
    %c0_i32_0 = arith.constant 0 : i32
    return %arg0, %c0_i32 : i32, i32
  }
  func.func @transform_1(%arg0: i32) -> (i32, i32) {
    %c0_i32 = arith.constant 0 : i32
    %c0_i32_0 = arith.constant 0 : i32
    %c0_i32_1 = arith.constant 0 : i32
    return %c0_i32, %c0_i32_0 : i32, i32
  }
  func.func @transform_2(%arg0: i32) -> (i32, i32) {
    %c0_i32 = arith.constant 0 : i32
    %c0_i32_0 = arith.constant 0 : i32
    %c0_i32_1 = arith.constant 0 : i32
    return %c0_i32, %c0_i32_0 : i32, i32
  }
  func.func @transform_3(%arg0: i32) -> (i32, i32) {
    %c0_i32 = arith.constant 0 : i32
    %c0_i32_0 = arith.constant 0 : i32
    %c0_i32_1 = arith.constant 0 : i32
    return %c0_i32, %c0_i32_0 : i32, i32
  }
  func.func @transform_4(%arg0: i32) -> (i32, i32) {
    %c0_i32 = arith.constant 0 : i32
    %c0_i32_0 = arith.constant 0 : i32
    %c0_i32_1 = arith.constant 0 : i32
    return %c0_i32, %c0_i32_0 : i32, i32
  }
  func.func @transform_5(%arg0: i32) -> (i32, i32) {
    %c0_i32 = arith.constant 0 : i32
    %c0_i32_0 = arith.constant 0 : i32
    %c0_i32_1 = arith.constant 0 : i32
    return %c0_i32, %c0_i32_0 : i32, i32
  }
  func.func @transform_6(%arg0: i32) -> (i32, i32) {
    %c0_i32 = arith.constant 0 : i32
    %c0_i32_0 = arith.constant 0 : i32
    %c0_i32_1 = arith.constant 0 : i32
    return %c0_i32, %c0_i32_0 : i32, i32
  }
  func.func @transform_7(%arg0: i32) -> (i32, i32) {
    %c0_i32 = arith.constant 0 : i32
    %c0_i32_0 = arith.constant 0 : i32
    return %arg0, %c0_i32 : i32, i32
  }
}

</mosaic_0001>

<llo_original>
// kernel: tpu_custom_call.1
$region0: #{tpu_custom_call.1}
  #allocation0 [shape = 'u32[]', space=smem, size = 0x4, offset = 0x4, fixed_abs, tag = 'smem constant byte address 0x4 - core index']
  #allocation1 [shape = 'u32[72,128]{1,0:T(1,128)}', space=vmem, size = 0x9000, scoped, tag = 'internal scratch']
  %s0 = inlined_call_operand.hbm [shape: f32[8,128], index: 0, kind: input, shape index: {}]
  %s1 = inlined_call_operand.hbm [shape: f32[128,128], index: 1, kind: input, shape index: {}]
  %s2 = inlined_call_operand.vmem [shape: f32[1,128], index: 2, kind: input, shape index: {}]
  %s3 = inlined_call_operand.hbm [shape: f32[128,128], index: 3, kind: input, shape index: {}]
  %s4 = inlined_call_operand.vmem [shape: f32[1,128], index: 4, kind: input, shape index: {}]
  %s5 = inlined_call_operand.hbm [shape: f32[128,128], index: 5, kind: input, shape index: {}]
  %s6 = inlined_call_operand.vmem [shape: f32[1,128], index: 6, kind: input, shape index: {}]
  %s7 = inlined_call_operand.hbm [shape: f32[8,128], index: 7, kind: output, shape index: {}]
  %s8 = sld [smem:[#allocation0]]
  $region54: #{tpu_custom_call.1} parent=0
    _
  %s10 = ssub.s32 1, %s8
  %s11 = scalar_select 0, %s10, %s8
  $region1: #{tpu_custom_call.1} parent=0
    #allocation2 [shape = 'u8[4096]{0}', space=vmem, size = 0x1000, scoped, tag = 'input window, operand 0, single buffered']
    #allocation3 [shape = 's32[1]{0}', space=sflag, size = 0x4, scoped, tag = 'scoped memory for tpu_custom_call.1']
    #allocation4 [shape = 's32[1]{0}', space=sflag, size = 0x4, scoped, tag = 'scoped memory for tpu_custom_call.1']
    #allocation5 [shape = 'u8[65536]{0}', space=vmem, size = 0x10000, scoped, tag = 'input window, operand 1, single buffered']
    #allocation6 [shape = 's32[1]{0}', space=sflag, size = 0x4, scoped, tag = 'scoped memory for tpu_custom_call.1']
    #allocation7 [shape = 'u8[65536]{0}', space=vmem, size = 0x10000, scoped, tag = 'input window, operand 3, single buffered']
    #allocation8 [shape = 'u8[65536]{0}', space=vmem, size = 0x10000, scoped, tag = 'input window, operand 5, single buffered']
    #allocation9 [shape = 's32[1]{0}', space=sflag, size = 0x4, scoped, tag = 'scoped memory for tpu_custom_call.1']
    #allocation10 [shape = 'u8[4096]{0}', space=vmem, size = 0x1000, scoped, tag = 'output window, operand 0, single buffered']
    %12 = vsyncpa [#allocation3], 0
    %13 = vsyncpa [#allocation6], 0
    %14 = vsyncpa [#allocation9], 0
    %15 = vsyncpa [#allocation4], 0
    // Predicated region
    $region2: #{tpu_custom_call.1} parent=1 // pred_check
      _
    $region3: #{tpu_custom_call.1} parent=1 // pred_check_branch
      %17 = sbr.rel (0) target = $region5
    $region4: #{tpu_custom_call.1} parent=1 // pred_region
      %19 = vsyncadd [#allocation3], 0
      %s21 = sshll.u32 %s0, 4
      %s22 = int_to_ptr.hbm [resolvable:$true] %s21
      %s23 = sshll.u32 [#allocation2], 4
      %s24 = int_to_ptr.vmem [resolvable:$true] %s23
      %26 = dma.hbm_to_vmem [thread:$0]  %s22, 128, %s24, [#allocation3]
    $region5: #{tpu_custom_call.1} parent=1 // pred_fallthru
      _
    // Predicated region
    $region6: #{tpu_custom_call.1} parent=1 // pred_check
      _
    $region7: #{tpu_custom_call.1} parent=1 // pred_check_branch
      %28 = sbr.rel (0) target = $region9
    $region8: #{tpu_custom_call.1} parent=1 // pred_region
      %30 = vsyncadd [#allocation6], 0
      %s31 = sshll.u32 %s1, 4
      %s32 = int_to_ptr.hbm [resolvable:$true] %s31
      %s33 = sshll.u32 [#allocation5], 4
      %s34 = int_to_ptr.vmem [resolvable:$true] %s33
      %39 = dma.hbm_to_vmem [thread:$0]  %s32, 2048, %s34, [#allocation6], 128, 128, 8
    $region9: #{tpu_custom_call.1} parent=1 // pred_fallthru
      _
    // Predicated region
    $region10: #{tpu_custom_call.1} parent=1 // pred_check
      _
    $region11: #{tpu_custom_call.1} parent=1 // pred_check_branch
      %41 = sbr.rel (0) target = $region13
    $region12: #{tpu_custom_call.1} parent=1 // pred_region
      _
    $region13: #{tpu_custom_call.1} parent=1 // pred_fallthru
      _
    // Predicated region
    $region14: #{tpu_custom_call.1} parent=1 // pred_check
      _
    $region15: #{tpu_custom_call.1} parent=1 // pred_check_branch
      %43 = sbr.rel (0) target = $region17
    $region16: #{tpu_custom_call.1} parent=1 // pred_region
      %45 = vsyncadd [#allocation6], 0
      %s46 = sshll.u32 %s3, 4
      %s47 = int_to_ptr.hbm [resolvable:$true] %s46
      %s48 = sshll.u32 [#allocation7], 4
      %s49 = int_to_ptr.vmem [resolvable:$true] %s48
      %54 = dma.hbm_to_vmem [thread:$0]  %s47, 2048, %s49, [#allocation6], 128, 128, 8
    $region17: #{tpu_custom_call.1} parent=1 // pred_fallthru
      _
    // Predicated region
    $region18: #{tpu_custom_call.1} parent=1 // pred_check
      _
    $region19: #{tpu_custom_call.1} parent=1 // pred_check_branch
      %56 = sbr.rel (0) target = $region21
    $region20: #{tpu_custom_call.1} parent=1 // pred_region
      _
    $region21: #{tpu_custom_call.1} parent=1 // pred_fallthru
      _
    // Predicated region
    $region22: #{tpu_custom_call.1} parent=1 // pred_check
      _
    $region23: #{tpu_custom_call.1} parent=1 // pred_check_branch
      %58 = sbr.rel (0) target = $region25
    $region24: #{tpu_custom_call.1} parent=1 // pred_region
      %60 = vsyncadd [#allocation9], 0
      %s61 = sshll.u32 %s5, 4
      %s62 = int_to_ptr.hbm [resolvable:$true] %s61
      %s63 = sshll.u32 [#allocation8], 4
      %s64 = int_to_ptr.vmem [resolvable:$true] %s63
      %69 = dma.hbm_to_vmem [thread:$0]  %s62, 2048, %s64, [#allocation9], 128, 128, 8
    $region25: #{tpu_custom_call.1} parent=1 // pred_fallthru
      _
    // Predicated region
    $region26: #{tpu_custom_call.1} parent=1 // pred_check
      _
    $region27: #{tpu_custom_call.1} parent=1 // pred_check_branch
      %71 = sbr.rel (0) target = $region29
    $region28: #{tpu_custom_call.1} parent=1 // pred_region
      _
    $region29: #{tpu_custom_call.1} parent=1 // pred_fallthru
      _
    // Predicated region
    $region30: #{tpu_custom_call.1} parent=1 // pred_check
      _
    $region31: #{tpu_custom_call.1} parent=1 // pred_check_branch
      %73 = sbr.rel (0) target = $region33
    $region32: #{tpu_custom_call.1} parent=1 // pred_region
      %75 = dma.done [#allocation3], 128
    $region33: #{tpu_custom_call.1} parent=1 // pred_fallthru
      _
    // Predicated region
    $region34: #{tpu_custom_call.1} parent=1 // pred_check
      _
    $region35: #{tpu_custom_call.1} parent=1 // pred_check_branch
      %77 = sbr.rel (0) target = $region37
    $region36: #{tpu_custom_call.1} parent=1 // pred_region
      %79 = dma.done [#allocation6], 2048
    $region37: #{tpu_custom_call.1} parent=1 // pred_fallthru
      _
    // Predicated region
    $region38: #{tpu_custom_call.1} parent=1 // pred_check
      _
    $region39: #{tpu_custom_call.1} parent=1 // pred_check_branch
      %81 = sbr.rel (0) target = $region41
    $region40: #{tpu_custom_call.1} parent=1 // pred_region
      %83 = dma.done [#allocation6], 2048
    $region41: #{tpu_custom_call.1} parent=1 // pred_fallthru
      _
    // Predicated region
    $region42: #{tpu_custom_call.1} parent=1 // pred_check
      _
    $region43: #{tpu_custom_call.1} parent=1 // pred_check_branch
      %85 = sbr.rel (0) target = $region45
    $region44: #{tpu_custom_call.1} parent=1 // pred_region
      %87 = dma.done [#allocation9], 2048
    $region45: #{tpu_custom_call.1} parent=1 // pred_fallthru
      _
    %v88 = vld [vmem:[#allocation2] sm:$0xff]
    %v89 = vld [vmem:[#allocation5] sm:$0xff]
    %v90 = vld [vmem:[#allocation5 + $0x8] sm:$0xff]
    %v91 = vld [vmem:[#allocation5 + $0x10] sm:$0xff]
    %v92 = vld [vmem:[#allocation5 + $0x18] sm:$0xff]
    %v93 = vld [vmem:[#allocation5 + $0x20] sm:$0xff]
    %v94 = vld [vmem:[#allocation5 + $0x28] sm:$0xff]
    %v95 = vld [vmem:[#allocation5 + $0x30] sm:$0xff]
    %v96 = vld [vmem:[#allocation5 + $0x38] sm:$0xff]
    %v97 = vld [vmem:[#allocation5 + $0x40] sm:$0xff]
    %v98 = vld [vmem:[#allocation5 + $0x48] sm:$0xff]
    %v99 = vld [vmem:[#allocation5 + $0x50] sm:$0xff]
    %v100 = vld [vmem:[#allocation5 + $0x58] sm:$0xff]
    %v101 = vld [vmem:[#allocation5 + $0x60] sm:$0xff]
    %v102 = vld [vmem:[#allocation5 + $0x68] sm:$0xff]
    %v103 = vld [vmem:[#allocation5 + $0x70] sm:$0xff]
    %v104 = vld [vmem:[#allocation5 + $0x78] sm:$0xff]
    %v105 = vld [vmem:[%s2] sm:$0x1]
    %v107 = vperm.slane %v105, 0
    %109 = vmatpush.msra.mxu0 %v104
    %110 = vmatpush.msra.mxu0 %v103
    %111 = vmatpush.msra.mxu0 %v102
    %112 = vmatpush.msra.mxu0 %v101
    %113 = vmatpush.msra.mxu0 %v100
    %114 = vmatpush.msra.mxu0 %v99
    %115 = vmatpush.msra.mxu0 %v98
    %116 = vmatpush.msra.mxu0 %v97
    %117 = vmatpush.msra.mxu0 %v96
    %118 = vmatpush.msra.mxu0 %v95
    %119 = vmatpush.msra.mxu0 %v94
    %120 = vmatpush.msra.mxu0 %v93
    %121 = vmatpush.msra.mxu0 %v92
    %122 = vmatpush.msra.mxu0 %v91
    %123 = vmatpush.msra.mxu0 %v90
    %124 = vmatpush.msra.mxu0 %v89
    %125 = vmatmul.f32.gmra.mxu0 %v88
    %v126 = vpop.f32.mrf.mxu0
    %v127 = vadd.f32 %v107, %v126
    %128 = vdwg.mxu0
    %v129 = vmin.f32 %v127, 0.0
    %v130 = vmul.f32 %v129, 1.442695
    %v131 = vpow.pop %v130
    %v132 = vsub.f32 %v131, 1.0
    %v133 = vmul.f32 %v132, 1.7580993
    %vm134 = vcmp.gt.f32.partialorder %v127, 0.0
    %v135 = vmul.f32 %v127, 1.050701
    %v136 = vsel %vm134, %v135, %v133
    %v137 = vld [vmem:[#allocation7] sm:$0xff]
    %v138 = vld [vmem:[#allocation7 + $0x8] sm:$0xff]
    %v139 = vld [vmem:[#allocation7 + $0x10] sm:$0xff]
    %v140 = vld [vmem:[#allocation7 + $0x18] sm:$0xff]
    %v141 = vld [vmem:[#allocation7 + $0x20] sm:$0xff]
    %v142 = vld [vmem:[#allocation7 + $0x28] sm:$0xff]
    %v143 = vld [vmem:[#allocation7 + $0x30] sm:$0xff]
    %v144 = vld [vmem:[#allocation7 + $0x38] sm:$0xff]
    %v145 = vld [vmem:[#allocation7 + $0x40] sm:$0xff]
    %v146 = vld [vmem:[#allocation7 + $0x48] sm:$0xff]
    %v147 = vld [vmem:[#allocation7 + $0x50] sm:$0xff]
    %v148 = vld [vmem:[#allocation7 + $0x58] sm:$0xff]
    %v149 = vld [vmem:[#allocation7 + $0x60] sm:$0xff]
    %v150 = vld [vmem:[#allocation7 + $0x68] sm:$0xff]
    %v151 = vld [vmem:[#allocation7 + $0x70] sm:$0xff]
    %v152 = vld [vmem:[#allocation7 + $0x78] sm:$0xff]
    %v153 = vld [vmem:[%s4] sm:$0x1]
    %v155 = vperm.slane %v153, 0
    %157 = vmatpush.msra.mxu0 %v152
    %158 = vmatpush.msra.mxu0 %v151
    %159 = vmatpush.msra.mxu0 %v150
    %160 = vmatpush.msra.mxu0 %v149
    %161 = vmatpush.msra.mxu0 %v148
    %162 = vmatpush.msra.mxu0 %v147
    %163 = vmatpush.msra.mxu0 %v146
    %164 = vmatpush.msra.mxu0 %v145
    %165 = vmatpush.msra.mxu0 %v144
    %166 = vmatpush.msra.mxu0 %v143
    %167 = vmatpush.msra.mxu0 %v142
    %168 = vmatpush.msra.mxu0 %v141
    %169 = vmatpush.msra.mxu0 %v140
    %170 = vmatpush.msra.mxu0 %v139
    %171 = vmatpush.msra.mxu0 %v138
    %172 = vmatpush.msra.mxu0 %v137
    %173 = vmatmul.f32.gmra.mxu0 %v136
    %v174 = vpop.f32.mrf.mxu0
    %v175 = vadd.f32 %v155, %v174
    %176 = vdwg.mxu0
    %v177 = vmin.f32 %v175, 0.0
    %v178 = vmul.f32 %v177, 1.442695
    %v179 = vpow.pop %v178
    %v180 = vsub.f32 %v179, 1.0
    %v181 = vmul.f32 %v180, 1.7580993
    %vm182 = vcmp.gt.f32.partialorder %v175, 0.0
    %v183 = vmul.f32 %v175, 1.050701
    %v184 = vsel %vm182, %v183, %v181
    %v185 = vld [vmem:[#allocation8] sm:$0xff]
    %v186 = vld [vmem:[#allocation8 + $0x8] sm:$0xff]
    %v187 = vld [vmem:[#allocation8 + $0x10] sm:$0xff]
    %v188 = vld [vmem:[#allocation8 + $0x18] sm:$0xff]
    %v189 = vld [vmem:[#allocation8 + $0x20] sm:$0xff]
    %v190 = vld [vmem:[#allocation8 + $0x28] sm:$0xff]
    %v191 = vld [vmem:[#allocation8 + $0x30] sm:$0xff]
    %v192 = vld [vmem:[#allocation8 + $0x38] sm:$0xff]
    %v193 = vld [vmem:[#allocation8 + $0x40] sm:$0xff]
    %v194 = vld [vmem:[#allocation8 + $0x48] sm:$0xff]
    %v195 = vld [vmem:[#allocation8 + $0x50] sm:$0xff]
    %v196 = vld [vmem:[#allocation8 + $0x58] sm:$0xff]
    %v197 = vld [vmem:[#allocation8 + $0x60] sm:$0xff]
    %v198 = vld [vmem:[#allocation8 + $0x68] sm:$0xff]
    %v199 = vld [vmem:[#allocation8 + $0x70] sm:$0xff]
    %v200 = vld [vmem:[#allocation8 + $0x78] sm:$0xff]
    %v201 = vld [vmem:[%s6] sm:$0x1]
    %v203 = vperm.slane %v201, 0
    %205 = vmatpush.msra.mxu0 %v200
    %206 = vmatpush.msra.mxu0 %v199
    %207 = vmatpush.msra.mxu0 %v198
    %208 = vmatpush.msra.mxu0 %v197
    %209 = vmatpush.msra.mxu0 %v196
    %210 = vmatpush.msra.mxu0 %v195
    %211 = vmatpush.msra.mxu0 %v194
    %212 = vmatpush.msra.mxu0 %v193
    %213 = vmatpush.msra.mxu0 %v192
    %214 = vmatpush.msra.mxu0 %v191
    %215 = vmatpush.msra.mxu0 %v190
    %216 = vmatpush.msra.mxu0 %v189
    %217 = vmatpush.msra.mxu0 %v188
    %218 = vmatpush.msra.mxu0 %v187
    %219 = vmatpush.msra.mxu0 %v186
    %220 = vmatpush.msra.mxu0 %v185
    %221 = vmatmul.f32.gmra.mxu0 %v184
    %v222 = vpop.f32.mrf.mxu0
    %v223 = vadd.f32 %v203, %v222
    %224 = vdwg.mxu0
    %225 = vst [vmem:[#allocation10] sm:$0xff] %v223
    // Predicated region
    $region46: #{tpu_custom_call.1} parent=1 // pred_check
      _
    $region47: #{tpu_custom_call.1} parent=1 // pred_check_branch
      %227 = sbr.rel (0) target = $region49
    $region48: #{tpu_custom_call.1} parent=1 // pred_region
      %229 = vsyncadd [#allocation4], 0
      %s231 = sshll.u32 [#allocation10], 4
      %s232 = int_to_ptr.vmem [resolvable:$true] %s231
      %s233 = sshll.u32 %s7, 4
      %s234 = int_to_ptr.hbm [resolvable:$true] %s233
      %236 = dma.vmem_to_hbm [thread:$0]  %s232, 128, %s234, [#allocation4]
    $region49: #{tpu_custom_call.1} parent=1 // pred_fallthru
      _
    // Predicated region
    $region50: #{tpu_custom_call.1} parent=1 // pred_check
      _
    $region51: #{tpu_custom_call.1} parent=1 // pred_check_branch
      %238 = sbr.rel (0) target = $region53
    $region52: #{tpu_custom_call.1} parent=1 // pred_region
      %240 = dma.done [#allocation4], 128
    $region53: #{tpu_custom_call.1} parent=1 // pred_fallthru
      _
    %241 = vsyncpa [#allocation3], 1
    %242 = vsyncpa [#allocation6], 1
    %243 = vsyncpa [#allocation9], 1
    %244 = vsyncpa [#allocation4], 1

</llo_original>
